<compile_context>
chip_gen: v6e
topology: v6e:2x2x1
jax: 0.10.0
libtpu: 0.0.40
codegen_flags: <defaults>
</compile_context>

<pallas_src>
import math
import jax
import jax.numpy as jnp
from jax.experimental import pallas as pl
from jax.experimental.pallas import tpu as pltpu

_BLOCK_F32_BYTES = 4 * 1024 * 1024    # target f32 working-set per block (~4 MiB)
_VMEM_LIMIT_BYTES = 48 * 1024 * 1024  # 2x(in+out) double-buffers + f32 temps ~ 28 MiB
_MAX_TM = 4096                        # row-tile cap for narrow softmax widths


def _softmax_lane_kernel(x_ref, o_ref):
    # Block (tm, d): softmax over the lane (last) axis.
    x = x_ref[...].astype(jnp.float32)
    e = jnp.exp(x)                                # EUP transcendental
    s = e.sum(axis=-1, keepdims=True)             # XLU cross-lane reduce
    inv = pl.reciprocal(s, approx=False)          # 1 op per row vs d divides
    o_ref[...] = (e * inv).astype(o_ref.dtype)    # VPU broadcast multiply + cast


def _softmax_sublane_kernel(x_ref, o_ref):
    # Block (t_outer, d, t_inner): softmax over the sublane (-2) axis.
    x = x_ref[...].astype(jnp.float32)
    e = jnp.exp(x)
    s = e.sum(axis=-2, keepdims=True)             # XLU cross-sublane reduce
    inv = pl.reciprocal(s, approx=False)
    o_ref[...] = (e * inv).astype(o_ref.dtype)


def _sublane_pack(dtype):
    # Rows per sublane-pack for the dtype: f32 -> 8, bf16 -> 16, int8/fp8 -> 32.
    return {1: 32, 2: 16}.get(jnp.dtype(dtype).itemsize, 8)


def _cost(n_elems, itemsize):
    return pl.CostEstimate(
        flops=2 * n_elems,                 # row sum + normalize multiply
        transcendentals=n_elems,           # exp
        bytes_accessed=2 * n_elems * itemsize,
    )


def pallas_softmax(x, dim):
    """Softmax of `x` along axis `dim`, matching the PyTorch module semantics."""
    ndim = x.ndim
    dim = dim % ndim
    itemsize = jnp.dtype(x.dtype).itemsize

    if dim == ndim - 1:
        # ---- Trailing axis: 2-D row softmax, reduce over lanes. ----
        d = x.shape[-1]
        m = math.prod(x.shape[:-1]) if ndim > 1 else 1
        x2d = x.reshape(m, d)                       # free (row-major) reshape

        pack = _sublane_pack(x.dtype)
        cap_rows = max(pack, _BLOCK_F32_BYTES // (max(d, 1) * 4))
        tm = min(_MAX_TM, cap_rows, pl.cdiv(m, pack) * pack)
        if m > pack:
            # Keep >=2 parallel blocks when m allows (v7x has 2 TensorCores).
            tm = min(tm, pl.cdiv(pl.cdiv(m, 2), pack) * pack)
        tm = max(pack, (tm // pack) * pack)

        out = pl.pallas_call(
            _softmax_lane_kernel,
            out_shape=jax.ShapeDtypeStruct((m, d), x.dtype),
            grid_spec=pltpu.PrefetchScalarGridSpec(
                num_scalar_prefetch=0,
                grid=(pl.cdiv(m, tm),),
                in_specs=[pl.BlockSpec((tm, d), lambda i: (i, 0))],
                out_specs=pl.BlockSpec((tm, d), lambda i: (i, 0)),
            ),
            compiler_params=pltpu.CompilerParams(
                dimension_semantics=("parallel",),
                vmem_limit_bytes=_VMEM_LIMIT_BYTES,
            ),
            cost_estimate=_cost(m * d, itemsize),
        )(x2d)
        return out.reshape(x.shape)

    # ---- Non-trailing axis: view as (outer, d, inner) with NO transpose; ----
    # ---- reduce over the sublane (-2) axis in-kernel.                    ----
    d = x.shape[dim]
    outer = math.prod(x.shape[:dim]) if dim > 0 else 1
    inner = math.prod(x.shape[dim + 1:])
    x3d = x.reshape(outer, d, inner)                # free (row-major) reshape

    lane_budget = max(128, _BLOCK_F32_BYTES // (max(d, 1) * 4))
    if inner <= 128 or inner <= lane_budget:
        t_inner = inner                             # full dim: always legal
    else:
        t_inner = max(128, (lane_budget // 128) * 128)
    t_outer = max(1, min(outer, _BLOCK_F32_BYTES // (max(d * t_inner, 1) * 4)))
    # Keep >=2 parallel blocks when possible (v7x megacore).
    if pl.cdiv(outer, t_outer) * pl.cdiv(inner, t_inner) == 1:
        if outer > 1:
            t_outer = pl.cdiv(outer, 2)
        elif inner > 128:
            t_inner = max(128, pl.cdiv(pl.cdiv(inner, 2), 128) * 128)

    out = pl.pallas_call(
        _softmax_sublane_kernel,
        out_shape=jax.ShapeDtypeStruct((outer, d, inner), x.dtype),
        grid_spec=pltpu.PrefetchScalarGridSpec(
            num_scalar_prefetch=0,
            grid=(pl.cdiv(outer, t_outer), pl.cdiv(inner, t_inner)),
            in_specs=[pl.BlockSpec((t_outer, d, t_inner), lambda i, j: (i, 0, j))],
            out_specs=pl.BlockSpec((t_outer, d, t_inner), lambda i, j: (i, 0, j)),
        ),
        compiler_params=pltpu.CompilerParams(
            dimension_semantics=("parallel", "parallel"),
            vmem_limit_bytes=_VMEM_LIMIT_BYTES,
        ),
        cost_estimate=_cost(outer * d * inner, itemsize),
    )(x3d)
    return out.reshape(x.shape)


def _reference_softmax(x, dim):
    e = jnp.exp(x)
    return e / e.sum(axis=dim, keepdims=True)


if __name__ == "__main__":
    key = jax.random.PRNGKey(0)
    k1, k2, k3 = jax.random.split(key, 3)

    # Case 1: trailing-axis softmax (lane-reduce path), lane-dense width.
    x1 = jax.random.normal(k1, (2, 8, 128), jnp.float32)
    y1 = jax.block_until_ready(pallas_softmax(x1, dim=-1))
    assert y1.shape == x1.shape
    assert jnp.allclose(y1, _reference_softmax(x1, dim=-1), atol=1e-5, rtol=1e-5)

    # Case 2: non-trailing axis (sublane-reduce path, no transpose in HBM).
    x2 = jax.random.normal(k2, (2, 4, 16, 16), jnp.float32)
    y2 = jax.block_until_ready(pallas_softmax(x2, dim=1))
    assert y2.shape == x2.shape
    assert jnp.allclose(y2, _reference_softmax(x2, dim=1), atol=1e-5, rtol=1e-5)

    # Case 3: trailing axis that is not a multiple of 128 (masked lane handling).
    x3 = jax.random.normal(k3, (2, 3, 40), jnp.float32)
    y3 = jax.block_until_ready(pallas_softmax(x3, dim=-1))
    assert y3.shape == x3.shape
    assert jnp.allclose(y3, _reference_softmax(x3, dim=-1), atol=1e-5, rtol=1e-5)

    print("KERNEL_OK")
</pallas_src>

<mosaic_0001>
module attributes {stable_mosaic.version = 11 : i64} {
  func.func @_softmax_lane_kernel(%arg0: i32, %arg1: memref<8x128xf32, #tpu.memory_space<vmem>>, %arg2: memref<8x128xf32, #tpu.memory_space<vmem>>) attributes {dimension_semantics = [#tpu.dimension_semantics<parallel>], iteration_bounds = array<i64: 2>, scalar_prefetch = 0 : i64, scratch_operands = 0 : i64, tpu.core_type = #tpu.core_type<tc>, window_params = [{transform_indices = @transform_0, window_bounds = array<i64: 8, 128>}, {transform_indices = @transform_1, window_bounds = array<i64: 8, 128>}]} {
    %c0 = arith.constant 0 : index
    %c0_0 = arith.constant 0 : index
    %0 = vector.load %arg1[%c0, %c0_0] : memref<8x128xf32, #tpu.memory_space<vmem>>, vector<8x128xf32>
    %1 = math.exp %0 : vector<8x128xf32>
    %cst = arith.constant dense<0.000000e+00> : vector<8xf32>
    %2 = vector.multi_reduction <add>, %1, %cst [1] : vector<8x128xf32> to vector<8xf32>
    %3 = vector.shape_cast %2 : vector<8xf32> to vector<8x1xf32>
    %4 = tpu.reciprocal %3 : vector<8x1xf32> -> vector<8x1xf32>
    %5 = vector.broadcast %4 : vector<8x1xf32> to vector<8x128xf32>
    %6 = arith.mulf %1, %5 : vector<8x128xf32>
    %c0_1 = arith.constant 0 : index
    %c0_2 = arith.constant 0 : index
    %7 = vector.load %arg2[%c0_1, %c0_2] : memref<8x128xf32, #tpu.memory_space<vmem>>, vector<8x128xf32>
    tpu.vector_store %arg2[%c0_1, %c0_2], %6 {strides = array<i32>} : memref<8x128xf32, #tpu.memory_space<vmem>>, vector<8x128xf32>,
    return
  }
  func.func @transform_0(%arg0: i32) -> (i32, i32) {
    %c0_i32 = arith.constant 0 : i32
    %c0_i32_0 = arith.constant 0 : i32
    return %arg0, %c0_i32 : i32, i32
  }
  func.func @transform_1(%arg0: i32) -> (i32, i32) {
    %c0_i32 = arith.constant 0 : i32
    %c0_i32_0 = arith.constant 0 : i32
    return %arg0, %c0_i32 : i32, i32
  }
}

</mosaic_0001>

<llo_original>
// kernel: tpu_custom_call.1
$region0: #{tpu_custom_call.1}
  #allocation0 [shape = 'u32[]', space=smem, size = 0x4, offset = 0x4, fixed_abs, tag = 'smem constant byte address 0x4 - core index']
  #allocation1 [shape = 'u32[144,128]{1,0:T(1,128)}', space=vmem, size = 0x12000, scoped, tag = 'internal scratch']
  %s0 = inlined_call_operand.hbm [shape: f32[16,128], index: 0, kind: input, shape index: {}]
  %s1 = inlined_call_operand.hbm [shape: f32[16,128], index: 1, kind: output, shape index: {}]
  %s2 = sld [smem:[#allocation0]]
  $region41: #{tpu_custom_call.1} parent=0
    _
  %s4 = ssub.s32 1, %s2
  %s5 = scalar_select 0, %s4, %s2
  $region1: #{tpu_custom_call.1} parent=0
    #allocation2 [shape = 'u8[8192]{0}', space=vmem, size = 0x2000, scoped, tag = 'input window, operand 0']
    #allocation3 [shape = 's32[2]{0}', space=sflag, size = 0x8, scoped, tag = 'scoped memory for tpu_custom_call.1']
    #allocation4 [shape = 's32[2]{0}', space=sflag, size = 0x8, scoped, tag = 'scoped memory for tpu_custom_call.1']
    #allocation5 [shape = 'u8[8192]{0}', space=vmem, size = 0x2000, scoped, tag = 'output window, operand 0']
    %6 = vsyncpa [#allocation3], 0
    %s7 = scalar_lea.sflag [#allocation3], 1
    %8 = vsyncpa %s7, 0
    %9 = vsyncpa [#allocation4], 0
    %s10 = scalar_lea.sflag [#allocation4], 1
    %11 = vsyncpa %s10, 0
    loop: start=0, step=1, limit=4
    $region2: #{tpu_custom_call.1} parent=1 // loop_pre_header
      _
    $region3: #{tpu_custom_call.1} parent=1 // loop_header
      %s13 = sphi 0, %s17
      %p14 = scmp.ge.s32.totalorder %s13, 4
      %s23 = sphi 0, %s25
      %s26 = sphi 0, %s23
      %s27 = sphi 0, %s26
      %s43 = sphi 0, %s27
      %s49 = sphi 0, %s51
      %s52 = sphi 0, %s49
      %s53 = sphi 0, %s52
      %s69 = sphi 0, %s53
    $region4: #{tpu_custom_call.1} parent=1 // loop_header_branch
      %16 = sbr.rel (%p14) target = $region8
    $region5: #{tpu_custom_call.1} parent=1 // loop_body
      %s18 = ssub.s32 %s13, 1
      %s19 = ssub.s32 %s13, 2
      %s20 = sadd.s32 %s13, 1
      %s21 = ssub.s32 %s13, %s20
      %p22 = scmp.eq.s32.totalorder %s21, 0
      %s24 = sadd.s32 %s23, 1
      %s25 = scalar_select %p22, %s23, %s24
      %p28 = pneg %p22
      %p29 = scmp.eq.s32.totalorder %s13, 1
      %p30 = por %p28, %p29
      %p31 = scmp.ne.s32.totalorder %s23, %s26
      %p32 = scmp.eq.s32.totalorder %s13, 0
      %p33 = por %p31, %p32
      %p34 = scmp.ne.s32.totalorder %s23, %s26
      %p35 = scmp.eq.s32.totalorder %s18, 1
      %p36 = por %p34, %p35
      %p37 = scmp.ne.s32.totalorder %s26, %s27
      %p38 = scmp.eq.s32.totalorder %s18, 0
      %p39 = por %p37, %p38
      %p40 = scmp.ne.s32.totalorder %s26, %s27
      %p41 = scmp.eq.s32.totalorder %s19, 1
      %p42 = por %p40, %p41
      %p44 = scmp.ne.s32.totalorder %s27, %s43
      %p45 = scmp.eq.s32.totalorder %s19, 0
      %p46 = por %p44, %p45
      %s47 = ssub.s32 %s13, %s20
      %p48 = scmp.eq.s32.totalorder %s47, 0
      %s50 = sadd.s32 %s49, 1
      %s51 = scalar_select %p48, %s49, %s50
      %p54 = pneg %p48
      %p55 = scmp.eq.s32.totalorder %s13, 1
      %p56 = por %p54, %p55
      %p57 = scmp.ne.s32.totalorder %s49, %s52
      %p58 = scmp.eq.s32.totalorder %s13, 0
      %p59 = por %p57, %p58
      %p60 = scmp.ne.s32.totalorder %s49, %s52
      %p61 = scmp.eq.s32.totalorder %s18, 1
      %p62 = por %p60, %p61
      %p63 = scmp.ne.s32.totalorder %s52, %s53
      %p64 = scmp.eq.s32.totalorder %s18, 0
      %p65 = por %p63, %p64
      %p66 = scmp.ne.s32.totalorder %s52, %s53
      %p67 = scmp.eq.s32.totalorder %s19, 1
      %p68 = por %p66, %p67
      %p70 = scmp.ne.s32.totalorder %s53, %s69
      %p71 = scmp.eq.s32.totalorder %s19, 0
      %p72 = por %p70, %p71
      %p73 = scmp.le.s32.totalorder 1, %s13
      %p74 = scmp.lt.s32.totalorder %s13, 3
      %p75 = pnand %p73, %p74
      %p76 = pneg %p75
      // Predicated region
      $region9: #{tpu_custom_call.1} parent=5 // pred_check
        _
      $region10: #{tpu_custom_call.1} parent=5 // pred_check_branch
        %78 = sbr.rel (%p75) target = $region12
      $region11: #{tpu_custom_call.1} parent=5 // pred_region
        %s79 = ssub.s32 %s13, 1
      $region12: #{tpu_custom_call.1} parent=5 // pred_fallthru
        _
      %p80 = scmp.lt.s32.totalorder %s13, 2
      // Predicated region
      $region13: #{tpu_custom_call.1} parent=5 // pred_check
        %p81 = pneg %p80
      $region14: #{tpu_custom_call.1} parent=5 // pred_check_branch
        %83 = sbr.rel (%p81) target = $region16
      $region15: #{tpu_custom_call.1} parent=5 // pred_region
        // Predicated region
        $region17: #{tpu_custom_call.1} parent=15 // pred_check
          %p84 = pneg %p33
        $region18: #{tpu_custom_call.1} parent=15 // pred_check_branch
          %86 = sbr.rel (%p84) target = $region20
        $region19: #{tpu_custom_call.1} parent=15 // pred_region
          %s87 = sand.u32 %s23, 1
          %s88 = scalar_lea.sflag [#allocation3], %s87
          %s89 = sand.u32 %s23, 1
          %s90 = smul.addr %s89, 8
          %s91 = scalar_lea.vmem [#allocation2], %s90
          %s93 = ssub.s32 128, 128
          %94 = vsyncadd %s88, %s93
          %s95 = smul.addr %s13, 128
          %s96 = scalar_lea.hbm %s0, %s95
          %s98 = sshll.u32 %s91, 4
          %s99 = int_to_ptr.vmem [resolvable:$true] %s98
          %101 = dma.hbm_to_vmem [thread:$0]  %s96, 128, %s99, %s88
        $region20: #{tpu_custom_call.1} parent=15 // pred_fallthru
          _
      $region16: #{tpu_custom_call.1} parent=5 // pred_fallthru
        _
      %p102 = scmp.le.s32.totalorder 1, %s13
      %p103 = scmp.lt.s32.totalorder %s13, 3
      %p104 = pnand %p102, %p103
      %p105 = pneg %p104
      // Predicated region
      $region21: #{tpu_custom_call.1} parent=5 // pred_check
        _
      $region22: #{tpu_custom_call.1} parent=5 // pred_check_branch
        %107 = sbr.rel (%p104) target = $region24
      $region23: #{tpu_custom_call.1} parent=5 // pred_region
        %s108 = ssub.s32 %s13, 1
        %s109 = sand.u32 %s26, 1
        %s110 = scalar_lea.sflag [#allocation3], %s109
        %s111 = sand.u32 %s26, 1
        %s112 = smul.addr %s111, 8
        %s113 = scalar_lea.vmem [#allocation2], %s112
        // Predicated region
        $region25: #{tpu_custom_call.1} parent=23 // pred_check
          %p114 = pneg %p39
        $region26: #{tpu_custom_call.1} parent=23 // pred_check_branch
          %116 = sbr.rel (%p114) target = $region28
        $region27: #{tpu_custom_call.1} parent=23 // pred_region
          %117 = dma.done %s110, 128
        $region28: #{tpu_custom_call.1} parent=23 // pred_fallthru
          _
        %s118 = sand.u32 %s26, 1
        %s119 = scalar_lea.sflag [#allocation3], %s118
        %s120 = sand.u32 %s26, 1
        %s121 = smul.addr %s120, 8
        %s122 = scalar_lea.vmem [#allocation2], %s121
        %p123 = pneg %p39
        %p124 = pneg %p36
        %p125 = pneg %p65
        %p126 = pneg %p62
        %s127 = sand.u32 %s52, 1
        %s128 = scalar_lea.sflag [#allocation4], %s127
        %s129 = sand.u32 %s52, 1
        %s130 = smul.addr %s129, 8
        %s131 = scalar_lea.vmem [#allocation5], %s130
        %v132 = vld [vmem:[%s113] sm:$0xff]
        %v133 = vmul.f32 %v132, 1.442695
        %v134 = vpow.pop %v133
        %135 = vadd.xlane.f32.xlu0 %v134
        %v136 = vpop.xlane.xlu0 %135
        %v137 = vrcp.pop %v136
        %v138 = vmul.f32 %v134, %v137
        %139 = vst [vmem:[%s131] sm:$0xff] %v138
        %s140 = sand.u32 %s52, 1
        %s141 = scalar_lea.sflag [#allocation4], %s140
        %s142 = sand.u32 %s52, 1
        %s143 = smul.addr %s142, 8
        %s144 = scalar_lea.vmem [#allocation5], %s143
        // Predicated region
        $region29: #{tpu_custom_call.1} parent=23 // pred_check
          %p145 = pneg %p62
        $region30: #{tpu_custom_call.1} parent=23 // pred_check_branch
          %147 = sbr.rel (%p145) target = $region32
        $region31: #{tpu_custom_call.1} parent=23 // pred_region
          %s149 = ssub.s32 128, 128
          %150 = vsyncadd %s141, %s149
          %s151 = smul.addr %s18, 128
          %s152 = scalar_lea.hbm %s1, %s151
          %s154 = sshll.u32 %s144, 4
          %s155 = int_to_ptr.vmem [resolvable:$true] %s154
          %157 = dma.vmem_to_hbm [thread:$0]  %s155, 128, %s152, %s141
        $region32: #{tpu_custom_call.1} parent=23 // pred_fallthru
          _
      $region24: #{tpu_custom_call.1} parent=5 // pred_fallthru
        _
      %p158 = scmp.le.s32.totalorder 2, %s13
      // Predicated region
      $region33: #{tpu_custom_call.1} parent=5 // pred_check
        %p159 = pneg %p158
      $region34: #{tpu_custom_call.1} parent=5 // pred_check_branch
        %161 = sbr.rel (%p159) target = $region36
      $region35: #{tpu_custom_call.1} parent=5 // pred_region
        %s162 = ssub.s32 %s13, 2
        // Predicated region
        $region37: #{tpu_custom_call.1} parent=35 // pred_check
          %p163 = pneg %p68
        $region38: #{tpu_custom_call.1} parent=35 // pred_check_branch
          %165 = sbr.rel (%p163) target = $region40
        $region39: #{tpu_custom_call.1} parent=35 // pred_region
          %s166 = sand.u32 %s53, 1
          %s167 = scalar_lea.sflag [#allocation4], %s166
          %s168 = sand.u32 %s53, 1
          %s169 = smul.addr %s168, 8
          %s170 = scalar_lea.vmem [#allocation5], %s169
          %171 = dma.done %s167, 128
        $region40: #{tpu_custom_call.1} parent=35 // pred_fallthru
          _
      $region36: #{tpu_custom_call.1} parent=5 // pred_fallthru
        _
    $region6: #{tpu_custom_call.1} parent=1 // loop_footer
      %s17 = sadd.s32 1, %s13
    $region7: #{tpu_custom_call.1} parent=1 // loop_footer_branch
      %12 = sbr.rel target = $region3
    $region8: #{tpu_custom_call.1} parent=1 // loop_exit
      _
    %172 = vsyncpa [#allocation3], 1
    %s173 = scalar_lea.sflag [#allocation3], 1
    %174 = vsyncpa %s173, 1
    %175 = vsyncpa [#allocation4], 1
    %s176 = scalar_lea.sflag [#allocation4], 1
    %177 = vsyncpa %s176, 1

</llo_original>
